<compile_context>
chip_gen: v6e
topology: v6e:2x2x1
jax: 0.10.0
libtpu: 0.0.40
codegen_flags: <defaults>
</compile_context>

<pallas_src>
import functools

import jax
import jax.numpy as jnp
import numpy as np
from jax.experimental import pallas as pl
from jax.experimental.pallas import tpu as pltpu


# --------------------------------------------------------------------------- #
# small in-kernel math helpers (only exp / mul / add / where -> always lowers)
# --------------------------------------------------------------------------- #
def _erf(x):
    """Abramowitz & Stegun 7.1.26 erf approximation, |err| <= 1.5e-7."""
    a1, a2, a3, a4, a5 = 0.254829592, -0.284496736, 1.421413741, -1.453152027, 1.061405429
    p = 0.3275911
    ax = jnp.abs(x)
    t = 1.0 / (1.0 + p * ax)
    poly = ((((a5 * t + a4) * t + a3) * t + a2) * t + a1) * t
    y = 1.0 - poly * jnp.exp(-ax * ax)
    return jnp.where(x >= 0.0, y, -y)


def _gelu_exact(x):
    """Exact (erf-based) GELU, matching PyTorch nn.GELU() default."""
    return 0.5 * x * (1.0 + _erf(x * 0.7071067811865476))


def _elu(x):
    """ELU(alpha=1); clamp before exp so no inf intermediates are generated."""
    return jnp.where(x > 0.0, x, jnp.exp(jnp.minimum(x, 0.0)) - 1.0)


def _sigmoid(x):
    """sigmoid via EUP exp + approx reciprocal (both off the VPU slot)."""
    return pl.reciprocal(1.0 + jnp.exp(-x), approx=True)


# --------------------------------------------------------------------------- #
# kernels
# --------------------------------------------------------------------------- #
def _gga_fused_kernel(hsi_ref, lidar_ref, pp_ref, sw_ref, svec_ref, scal_ref,
                      out_ref, *, cq):
    """Single-pass kernel: whole (C, P) image resident per grid step.

    hsi_ref  : (1, C, P)  input image (any dtype, upcast to f32)
    lidar_ref: (1, 1, P)
    pp_ref   : (C, 4)     col0 = folded query-energy weights w_qe
                          col1 = key_conv weight  (rows [0:cq])
                          col2 = key_conv bias    (rows [0:cq])
                          col3 = energy weights for the key channels
    sw_ref   : (C, Cs)    spec_mlp weight, transposed (so the C-reduction is a
                          sublane reduction, no transpose needed in-kernel)
    svec_ref : (2, Cs)    row0 = spec_mlp bias, row1 = energy weights for spec
    scal_ref : (2,) SMEM  [gamma, c0] with c0 = we_q . b_q + b_e
    """
    x = hsi_ref[0].astype(jnp.float32)        # (C, P)
    lid = lidar_ref[0].astype(jnp.float32)    # (1, P)

    # spectral branch: pooled mean computed from the already-resident tile,
    # so hsi is NOT re-read from HBM for the global pooling.
    pooled = jnp.mean(x, axis=1, keepdims=True)                                # (C, 1)
    z = jnp.sum(sw_ref[...] * pooled, axis=0, keepdims=True) + svec_ref[0:1]   # (1, Cs)
    spec = _gelu_exact(z)
    e_spec = jnp.sum(spec * svec_ref[1:2], axis=1, keepdims=True)              # (1, 1)

    # query branch folded into the energy weights: e_q[p] = sum_c w_qe[c]*x[c,p]
    wqe = pp_ref[:, 0:1]                                                       # (C, 1)
    e_q = jnp.sum(x * wqe, axis=0, keepdims=True)                              # (1, P)

    # key branch: sum_c we_k[c] * ELU(w_k[c]*lidar + b_k[c])
    w_k = pp_ref[0:cq, 1:2]
    b_k = pp_ref[0:cq, 2:3]
    we_k = pp_ref[0:cq, 3:4]
    e_k = jnp.sum(we_k * _elu(w_k * lid + b_k), axis=0, keepdims=True)         # (1, P)

    gamma = scal_ref[0]
    energy = e_q + e_k + (e_spec + scal_ref[1])                                # (1, P)
    att = _sigmoid(energy)
    out_ref[0] = (x * (1.0 + gamma * att)).astype(out_ref.dtype)


def _gga_tiled_kernel(hsi_ref, lidar_ref, pp_ref, sp_ref, out_ref, *, cq):
    """Streaming per-pixel-tile kernel (spec branch pre-folded into sp_ref).

    sp_ref : (B+1,) SMEM  [gamma, e_base[0], ..., e_base[B-1]]
             e_base[b] = b_e + we_q.b_q + we_s.spec[b]
    All reductions are over the channel (sublane) axis only, so padded lanes
    of a ragged last pixel block never contaminate valid lanes.
    """
    b = pl.program_id(0)

    x = hsi_ref[0].astype(jnp.float32)        # (C, TP)
    lid = lidar_ref[0].astype(jnp.float32)    # (1, TP)

    wqe = pp_ref[:, 0:1]
    e_q = jnp.sum(x * wqe, axis=0, keepdims=True)                              # (1, TP)

    w_k = pp_ref[0:cq, 1:2]
    b_k = pp_ref[0:cq, 2:3]
    we_k = pp_ref[0:cq, 3:4]
    e_k = jnp.sum(we_k * _elu(w_k * lid + b_k), axis=0, keepdims=True)         # (1, TP)

    gamma = sp_ref[0]
    e_base = sp_ref[1 + b]                                                     # per-batch scalar
    att = _sigmoid(e_q + e_k + e_base)

    out_ref[0] = (x * (1.0 + gamma * att)).astype(out_ref.dtype)


# --------------------------------------------------------------------------- #
# wrapper
# --------------------------------------------------------------------------- #
def _round_up(x, m):
    return ((x + m - 1) // m) * m


def _device_vmem_bytes():
    """Per-core VMEM capacity; conservative (v7x) fallback if the query fails."""
    try:
        info = pltpu.get_tpu_info()
        for attr in ("vmem_capacity_bytes", "vmem_size_bytes", "vmem_bytes"):
            v = getattr(info, attr, None)
            if v:
                return int(v)
    except Exception:
        pass
    return 64 * 1024 * 1024


def geometry_guided_attention(hsi_nchw, lidar_nchw, params, *, mode="auto"):
    """mode: 'auto' (default), 'fused' (force single-pass), 'tiled' (force streaming)."""
    B, C, H, W = hsi_nchw.shape
    Cq, Cs = C // 8, C // 2
    P = H * W
    itemsize = jnp.dtype(hsi_nchw.dtype).itemsize

    # ---- generation-aware VMEM budget / tiling -----------------------------
    cap = _device_vmem_bytes()
    budget = int(0.55 * cap)                     # leave headroom for Mosaic scratch
    io_per_px = itemsize * (2 * C + 1)           # hsi in + lidar in + out
    f32_per_px = 4 * (C + Cq + 6)                # upcast + elementwise temporaries
    per_px = 2 * io_per_px + f32_per_px          # x2 = double-buffered pipeline
    p_pad = _round_up(P, 128)
    fused_need = p_pad * per_px + (1 << 20)
    use_fused = mode == "fused" or (mode == "auto" and fused_need <= budget)

    # ---- tiny plain-JAX glue: exact parameter folding -----------------------
    we = params["w_e"]
    weq, wek, wes = we[:Cq], we[Cq:2 * Cq], we[2 * Cq:]
    wqe = params["w_q"] @ weq                                            # (C,)
    c0 = jnp.dot(weq, params["b_q"]) + params["b_e"][0]                  # scalar

    pp = jnp.zeros((C, 4), jnp.float32)
    pp = pp.at[:, 0].set(wqe.astype(jnp.float32))
    pp = pp.at[:Cq, 1].set(params["w_k"].astype(jnp.float32))
    pp = pp.at[:Cq, 2].set(params["b_k"].astype(jnp.float32))
    pp = pp.at[:Cq, 3].set(wek.astype(jnp.float32))

    # channel-major, pixels on the lane axis (free reshapes, no transposes)
    hsi = hsi_nchw.reshape(B, C, P)
    lidar = lidar_nchw.reshape(B, 1, P)

    cost = pl.CostEstimate(
        flops=int(B * P * (5 * C + 4 * Cq + 12) + B * 2 * C * Cs),
        transcendentals=int(B * P * (Cq + 2) + B * 2 * Cs),
        bytes_accessed=int(B * P * (2 * C + 1) * itemsize))

    if use_fused:
        # ---- single-pass path: hsi read from HBM exactly once --------------
        sw = params["w_spec"].T.astype(jnp.float32)                       # (C, Cs)
        svec = jnp.stack([params["b_spec"], wes]).astype(jnp.float32)     # (2, Cs)
        scal = jnp.stack([params["gamma"][0], c0]).astype(jnp.float32)    # (2,)
        vmem_limit = int(min(cap, max(16 << 20, fused_need + (4 << 20))))

        out = pl.pallas_call(
            functools.partial(_gga_fused_kernel, cq=Cq),
            out_shape=jax.ShapeDtypeStruct((B, C, P), hsi.dtype),
            grid_spec=pltpu.PrefetchScalarGridSpec(
                num_scalar_prefetch=0,
                grid=(B,),
                in_specs=[
                    pl.BlockSpec((1, C, P), lambda b: (b, 0, 0)),          # hsi
                    pl.BlockSpec((1, 1, P), lambda b: (b, 0, 0)),          # lidar
                    pl.BlockSpec((C, 4), lambda b: (0, 0)),                # packed params
                    pl.BlockSpec((C, Cs), lambda b: (0, 0)),               # spec weight^T
                    pl.BlockSpec((2, Cs), lambda b: (0, 0)),               # spec bias / weights
                    pl.BlockSpec(memory_space=pltpu.MemorySpace.SMEM),     # scalars
                ],
                out_specs=pl.BlockSpec((1, C, P), lambda b: (b, 0, 0)),
            ),
            compiler_params=pltpu.CompilerParams(
                dimension_semantics=("parallel",),
                vmem_limit_bytes=vmem_limit),
            cost_estimate=cost,
        )(hsi, lidar, pp, sw, svec, scal)
        return out.reshape(B, C, H, W)

    # ---- tiled streaming path (large images): spec branch folded in wrapper -
    pooled = jnp.mean(hsi_nchw.astype(jnp.float32), axis=(2, 3))              # (B, C)
    spec = jax.nn.gelu(pooled @ params["w_spec"].T + params["b_spec"],
                       approximate=False)                                      # (B, Cs)
    e_base = spec @ wes + c0                                                   # (B,)
    sp = jnp.concatenate([params["gamma"].reshape(1),
                          e_base]).astype(jnp.float32)                         # (B+1,)

    # fixed, device-derived tile; ragged last block handled by Pallas padding
    tile_p = max(512, (budget // per_px) // 128 * 128)
    tile_p = min(tile_p, 32768, p_pad)
    n_p = pl.cdiv(P, tile_p)
    vmem_limit = int(min(cap, max(16 << 20, tile_p * per_px + (4 << 20))))

    out = pl.pallas_call(
        functools.partial(_gga_tiled_kernel, cq=Cq),
        out_shape=jax.ShapeDtypeStruct((B, C, P), hsi.dtype),
        grid_spec=pltpu.PrefetchScalarGridSpec(
            num_scalar_prefetch=0,
            grid=(B, n_p),
            in_specs=[
                pl.BlockSpec((1, C, tile_p), lambda b, p: (b, 0, p)),      # hsi
                pl.BlockSpec((1, 1, tile_p), lambda b, p: (b, 0, p)),      # lidar
                pl.BlockSpec((C, 4), lambda b, p: (0, 0)),                 # packed params
                pl.BlockSpec(memory_space=pltpu.MemorySpace.SMEM),         # scalars
            ],
            out_specs=pl.BlockSpec((1, C, tile_p), lambda b, p: (b, 0, p)),
        ),
        compiler_params=pltpu.CompilerParams(
            dimension_semantics=("parallel", "parallel"),
            vmem_limit_bytes=vmem_limit),
        cost_estimate=cost,
    )(hsi, lidar, pp, sp)
    return out.reshape(B, C, H, W)


# --------------------------------------------------------------------------- #
# reference + params
# --------------------------------------------------------------------------- #
def reference(hsi, lidar, params):
    """Pure-JAX NCHW reference mirroring the PyTorch forward."""
    B, C, H, W = hsi.shape
    Cq, Cs = C // 8, C // 2
    pooled = jnp.mean(hsi, axis=(2, 3))
    spec = jax.nn.gelu(pooled @ params["w_spec"].T + params["b_spec"], approximate=False)
    spec4 = jnp.broadcast_to(spec[:, :, None, None], (B, Cs, H, W))
    q = jnp.einsum("bchw,cq->bqhw", hsi, params["w_q"]) + params["b_q"][None, :, None, None]
    kl = lidar * params["w_k"].reshape(1, Cq, 1, 1) + params["b_k"][None, :, None, None]
    kl = jnp.where(kl > 0.0, kl, jnp.exp(kl) - 1.0)
    feat = jnp.concatenate([q, kl, spec4], axis=1)
    energy = jnp.einsum("bchw,c->bhw", feat, params["w_e"]) + params["b_e"][0]
    att = jax.nn.sigmoid(energy)[:, None, :, :]
    return hsi + params["gamma"][0] * att * hsi


def make_params(key, hsi_dim):
    C = hsi_dim
    Cq, Cs = C // 8, C // 2
    ks = jax.random.split(key, 8)
    scale = 0.1
    return {
        "w_q": scale * jax.random.normal(ks[0], (C, Cq), jnp.float32),     # query_conv weight^T
        "b_q": scale * jax.random.normal(ks[1], (Cq,), jnp.float32),
        "w_k": scale * jax.random.normal(ks[2], (Cq,), jnp.float32),       # key_conv (1->Cq)
        "b_k": scale * jax.random.normal(ks[3], (Cq,), jnp.float32),
        "w_spec": scale * jax.random.normal(ks[4], (Cs, C), jnp.float32),  # spec_mlp Linear
        "b_spec": scale * jax.random.normal(ks[5], (Cs,), jnp.float32),
        "w_e": scale * jax.random.normal(ks[6], (Cq + Cq + Cs,), jnp.float32),
        "b_e": scale * jax.random.normal(ks[7], (1,), jnp.float32),
        "gamma": jnp.full((1,), 0.1, jnp.float32),                         # nn.Parameter(ones*0.1)
    }


if __name__ == "__main__":
    key = jax.random.PRNGKey(0)
    k_p, k_h, k_l = jax.random.split(key, 3)

    B, C, H, W = 2, 32, 16, 16          # hsi_dim=32 -> Cq=4, Cs=16 ; lidar has 1 channel
    params = make_params(k_p, C)
    hsi_feat = jax.random.normal(k_h, (B, C, H, W), jnp.float32)
    lidar_elev = jax.random.normal(k_l, (B, 1, H, W), jnp.float32)

    ref = reference(hsi_feat, lidar_elev, params)

    # 1) fused single-pass path (hsi read from HBM exactly once), f32 I/O
    out_fused = jax.block_until_ready(
        geometry_guided_attention(hsi_feat, lidar_elev, params, mode="fused"))
    np.testing.assert_allclose(np.asarray(out_fused), np.asarray(ref), rtol=1e-3, atol=1e-3)

    # 2) tiled streaming path (fallback for images that do not fit VMEM), f32 I/O
    out_tiled = jax.block_until_ready(
        geometry_guided_attention(hsi_feat, lidar_elev, params, mode="tiled"))
    np.testing.assert_allclose(np.asarray(out_tiled), np.asarray(ref), rtol=1e-3, atol=1e-3)

    # 3) bf16 at the HBM boundary (compute stays f32 inside the kernel)
    hsi_bf = hsi_feat.astype(jnp.bfloat16)
    lidar_bf = lidar_elev.astype(jnp.bfloat16)
    out_bf = jax.block_until_ready(geometry_guided_attention(hsi_bf, lidar_bf, params))
    ref_bf = reference(hsi_bf.astype(jnp.float32), lidar_bf.astype(jnp.float32), params)
    np.testing.assert_allclose(np.asarray(out_bf.astype(jnp.float32)), np.asarray(ref_bf),
                               rtol=3e-2, atol=3e-2)

    print("KERNEL_OK")
</pallas_src>

<mosaic_0001>
module attributes {stable_mosaic.version = 11 : i64} {
  func.func @_gga_fused_kernel(%arg0: i32, %arg1: memref<1x32x256xf32, #tpu.memory_space<vmem>>, %arg2: memref<1x1x256xf32, #tpu.memory_space<vmem>>, %arg3: memref<32x4xf32, #tpu.memory_space<vmem>>, %arg4: memref<32x16xf32, #tpu.memory_space<vmem>>, %arg5: memref<2x16xf32, #tpu.memory_space<vmem>>, %arg6: memref<2xf32, #tpu.memory_space<smem>>, %arg7: memref<1x32x256xf32, #tpu.memory_space<vmem>>) attributes {dimension_semantics = [#tpu.dimension_semantics<parallel>], iteration_bounds = array<i64: 2>, scalar_prefetch = 0 : i64, scratch_operands = 0 : i64, tpu.core_type = #tpu.core_type<tc>, window_params = [{transform_indices = @transform_0, window_bounds = array<i64: 1, 32, 256>}, {transform_indices = @transform_1, window_bounds = array<i64: 1, 1, 256>}, {pipeline_mode = #tpu.pipeline_mode<synchronous>, transform_indices = @transform_2, window_bounds = array<i64: 32, 4>}, {pipeline_mode = #tpu.pipeline_mode<synchronous>, transform_indices = @transform_3, window_bounds = array<i64: 32, 16>}, {pipeline_mode = #tpu.pipeline_mode<synchronous>, transform_indices = @transform_4, window_bounds = array<i64: 2, 16>}, {transform_indices = @transform_5, window_bounds = array<i64: 2>}, {transform_indices = @transform_6, window_bounds = array<i64: 1, 32, 256>}]} {
    %c0 = arith.constant 0 : index
    %c0_0 = arith.constant 0 : index
    %c0_1 = arith.constant 0 : index
    %0 = vector.load %arg1[%c0, %c0_0, %c0_1] : memref<1x32x256xf32, #tpu.memory_space<vmem>>, vector<1x32x256xf32>
    %1 = vector.shape_cast %0 : vector<1x32x256xf32> to vector<32x256xf32>
    %c0_2 = arith.constant 0 : index
    %c0_3 = arith.constant 0 : index
    %c0_4 = arith.constant 0 : index
    %2 = vector.load %arg2[%c0_2, %c0_3, %c0_4] : memref<1x1x256xf32, #tpu.memory_space<vmem>>, vector<1x1x256xf32>
    %3 = vector.shape_cast %2 : vector<1x1x256xf32> to vector<1x256xf32>
    %cst = arith.constant dense<0.000000e+00> : vector<32xf32>
    %4 = vector.multi_reduction <add>, %1, %cst [1] : vector<32x256xf32> to vector<32xf32>
    %5 = vector.shape_cast %4 : vector<32xf32> to vector<32x1xf32>
    %cst_5 = arith.constant 2.560000e+02 : f32
    %6 = vector.broadcast %cst_5 : f32 to vector<32x1xf32>
    %7 = arith.divf %5, %6 : vector<32x1xf32>
    %c0_6 = arith.constant 0 : index
    %c0_7 = arith.constant 0 : index
    %8 = vector.load %arg4[%c0_6, %c0_7] : memref<32x16xf32, #tpu.memory_space<vmem>>, vector<32x16xf32>
    %9 = vector.broadcast %7 : vector<32x1xf32> to vector<32x16xf32>
    %10 = arith.mulf %8, %9 : vector<32x16xf32>
    %cst_8 = arith.constant dense<0.000000e+00> : vector<16xf32>
    %11 = vector.multi_reduction <add>, %10, %cst_8 [0] : vector<32x16xf32> to vector<16xf32>
    %12 = vector.shape_cast %11 : vector<16xf32> to vector<1x16xf32>
    %c0_9 = arith.constant 0 : index
    %c0_10 = arith.constant 0 : index
    %13 = vector.load %arg5[%c0_9, %c0_10] : memref<2x16xf32, #tpu.memory_space<vmem>>, vector<1x16xf32>
    %14 = arith.addf %12, %13 : vector<1x16xf32>
    %cst_11 = arith.constant 5.000000e-01 : f32
    %15 = vector.broadcast %cst_11 : f32 to vector<1x16xf32>
    %16 = arith.mulf %15, %14 : vector<1x16xf32>
    %cst_12 = arith.constant 0.707106769 : f32
    %17 = vector.broadcast %cst_12 : f32 to vector<1x16xf32>
    %18 = arith.mulf %14, %17 : vector<1x16xf32>
    %19 = math.absf %18 : vector<1x16xf32>
    %cst_13 = arith.constant 0.327591091 : f32
    %20 = vector.broadcast %cst_13 : f32 to vector<1x16xf32>
    %21 = arith.mulf %20, %19 : vector<1x16xf32>
    %cst_14 = arith.constant 1.000000e+00 : f32
    %22 = vector.broadcast %cst_14 : f32 to vector<1x16xf32>
    %23 = arith.addf %22, %21 : vector<1x16xf32>
    %cst_15 = arith.constant 1.000000e+00 : f32
    %24 = vector.broadcast %cst_15 : f32 to vector<1x16xf32>
    %25 = arith.divf %24, %23 : vector<1x16xf32>
    %cst_16 = arith.constant 1.06140542 : f32
    %26 = vector.broadcast %cst_16 : f32 to vector<1x16xf32>
    %27 = arith.mulf %26, %25 : vector<1x16xf32>
    %cst_17 = arith.constant -1.45315206 : f32
    %28 = vector.broadcast %cst_17 : f32 to vector<1x16xf32>
    %29 = arith.addf %27, %28 : vector<1x16xf32>
    %30 = arith.mulf %29, %25 : vector<1x16xf32>
    %cst_18 = arith.constant 1.42141378 : f32
    %31 = vector.broadcast %cst_18 : f32 to vector<1x16xf32>
    %32 = arith.addf %30, %31 : vector<1x16xf32>
    %33 = arith.mulf %32, %25 : vector<1x16xf32>
    %cst_19 = arith.constant -0.284496725 : f32
    %34 = vector.broadcast %cst_19 : f32 to vector<1x16xf32>
    %35 = arith.addf %33, %34 : vector<1x16xf32>
    %36 = arith.mulf %35, %25 : vector<1x16xf32>
    %cst_20 = arith.constant 0.254829586 : f32
    %37 = vector.broadcast %cst_20 : f32 to vector<1x16xf32>
    %38 = arith.addf %36, %37 : vector<1x16xf32>
    %39 = arith.mulf %38, %25 : vector<1x16xf32>
    %cst_21 = arith.constant 0.000000e+00 : f32
    %40 = vector.broadcast %cst_21 : f32 to vector<1x16xf32>
    %41 = arith.subf %40, %19 : vector<1x16xf32>
    %42 = arith.mulf %41, %19 : vector<1x16xf32>
    %43 = math.exp %42 : vector<1x16xf32>
    %44 = arith.mulf %39, %43 : vector<1x16xf32>
    %cst_22 = arith.constant 1.000000e+00 : f32
    %45 = vector.broadcast %cst_22 : f32 to vector<1x16xf32>
    %46 = arith.subf %45, %44 : vector<1x16xf32>
    %cst_23 = arith.constant 0.000000e+00 : f32
    %47 = vector.broadcast %cst_23 : f32 to vector<1x16xf32>
    %48 = arith.cmpf oge, %18, %47 : vector<1x16xf32>
    %cst_24 = arith.constant 0.000000e+00 : f32
    %49 = vector.broadcast %cst_24 : f32 to vector<1x16xf32>
    %50 = arith.subf %49, %46 : vector<1x16xf32>
    %51 = arith.select %48, %46, %50 : vector<1x16xi1>, vector<1x16xf32>
    %cst_25 = arith.constant 1.000000e+00 : f32
    %52 = vector.broadcast %cst_25 : f32 to vector<1x16xf32>
    %53 = arith.addf %52, %51 : vector<1x16xf32>
    %54 = arith.mulf %16, %53 : vector<1x16xf32>
    %c1 = arith.constant 1 : index
    %c0_26 = arith.constant 0 : index
    %55 = vector.load %arg5[%c1, %c0_26] : memref<2x16xf32, #tpu.memory_space<vmem>>, vector<1x16xf32>
    %56 = arith.mulf %54, %55 : vector<1x16xf32>
    %cst_27 = arith.constant dense<0.000000e+00> : vector<1xf32>
    %57 = vector.multi_reduction <add>, %56, %cst_27 [1] : vector<1x16xf32> to vector<1xf32>
    %58 = vector.shape_cast %57 : vector<1xf32> to vector<1x1xf32>
    %c0_28 = arith.constant 0 : index
    %c0_29 = arith.constant 0 : index
    %59 = vector.load %arg3[%c0_28, %c0_29] : memref<32x4xf32, #tpu.memory_space<vmem>>, vector<32x1xf32>
    %60 = vector.broadcast %59 : vector<32x1xf32> to vector<32x256xf32>
    %61 = arith.mulf %1, %60 : vector<32x256xf32>
    %cst_30 = arith.constant dense<0.000000e+00> : vector<256xf32>
    %62 = vector.multi_reduction <add>, %61, %cst_30 [0] : vector<32x256xf32> to vector<256xf32>
    %63 = vector.shape_cast %62 : vector<256xf32> to vector<1x256xf32>
    %c0_31 = arith.constant 0 : index
    %c1_32 = arith.constant 1 : index
    %64 = vector.load %arg3[%c0_31, %c1_32] : memref<32x4xf32, #tpu.memory_space<vmem>>, vector<4x1xf32>
    %c0_33 = arith.constant 0 : index
    %c2 = arith.constant 2 : index
    %65 = vector.load %arg3[%c0_33, %c2] : memref<32x4xf32, #tpu.memory_space<vmem>>, vector<4x1xf32>
    %c0_34 = arith.constant 0 : index
    %c3 = arith.constant 3 : index
    %66 = vector.load %arg3[%c0_34, %c3] : memref<32x4xf32, #tpu.memory_space<vmem>>, vector<4x1xf32>
    %67 = vector.broadcast %64 : vector<4x1xf32> to vector<4x256xf32>
    %68 = vector.broadcast %3 : vector<1x256xf32> to vector<4x256xf32>
    %69 = arith.mulf %67, %68 : vector<4x256xf32>
    %70 = vector.broadcast %65 : vector<4x1xf32> to vector<4x256xf32>
    %71 = arith.addf %69, %70 : vector<4x256xf32>
    %cst_35 = arith.constant 0.000000e+00 : f32
    %72 = vector.broadcast %cst_35 : f32 to vector<4x256xf32>
    %73 = arith.cmpf ogt, %71, %72 : vector<4x256xf32>
    %cst_36 = arith.constant 0.000000e+00 : f32
    %74 = vector.broadcast %cst_36 : f32 to vector<4x256xf32>
    %75 = arith.minimumf %71, %74 : vector<4x256xf32>
    %76 = math.exp %75 : vector<4x256xf32>
    %cst_37 = arith.constant 1.000000e+00 : f32
    %77 = vector.broadcast %cst_37 : f32 to vector<4x256xf32>
    %78 = arith.subf %76, %77 : vector<4x256xf32>
    %79 = arith.select %73, %71, %78 : vector<4x256xi1>, vector<4x256xf32>
    %80 = vector.broadcast %66 : vector<4x1xf32> to vector<4x256xf32>
    %81 = arith.mulf %80, %79 : vector<4x256xf32>
    %cst_38 = arith.constant dense<0.000000e+00> : vector<256xf32>
    %82 = vector.multi_reduction <add>, %81, %cst_38 [0] : vector<4x256xf32> to vector<256xf32>
    %83 = vector.shape_cast %82 : vector<256xf32> to vector<1x256xf32>
    %c0_39 = arith.constant 0 : index
    %84 = memref.load %arg6[%c0_39] : memref<2xf32, #tpu.memory_space<smem>>
    %85 = arith.addf %63, %83 : vector<1x256xf32>
    %c1_40 = arith.constant 1 : index
    %86 = memref.load %arg6[%c1_40] : memref<2xf32, #tpu.memory_space<smem>>
    %87 = vector.broadcast %86 : f32 to vector<1x1xf32>
    %88 = arith.addf %58, %87 : vector<1x1xf32>
    %89 = vector.broadcast %88 : vector<1x1xf32> to vector<1x256xf32>
    %90 = arith.addf %85, %89 : vector<1x256xf32>
    %cst_41 = arith.constant 0.000000e+00 : f32
    %91 = vector.broadcast %cst_41 : f32 to vector<1x256xf32>
    %92 = arith.subf %91, %90 : vector<1x256xf32>
    %93 = math.exp %92 : vector<1x256xf32>
    %cst_42 = arith.constant 1.000000e+00 : f32
    %94 = vector.broadcast %cst_42 : f32 to vector<1x256xf32>
    %95 = arith.addf %94, %93 : vector<1x256xf32>
    %96 = tpu.reciprocal %95 {approx = true} : vector<1x256xf32> -> vector<1x256xf32>
    %97 = vector.broadcast %84 : f32 to vector<1x256xf32>
    %98 = arith.mulf %97, %96 : vector<1x256xf32>
    %cst_43 = arith.constant 1.000000e+00 : f32
    %99 = vector.broadcast %cst_43 : f32 to vector<1x256xf32>
    %100 = arith.addf %99, %98 : vector<1x256xf32>
    %101 = vector.broadcast %100 : vector<1x256xf32> to vector<32x256xf32>
    %102 = arith.mulf %1, %101 : vector<32x256xf32>
    %c0_44 = arith.constant 0 : index
    %c0_45 = arith.constant 0 : index
    %c0_46 = arith.constant 0 : index
    %103 = vector.load %arg7[%c0_44, %c0_45, %c0_46] : memref<1x32x256xf32, #tpu.memory_space<vmem>>, vector<1x32x256xf32>
    %104 = vector.shape_cast %103 : vector<1x32x256xf32> to vector<32x256xf32>
    %105 = vector.shape_cast %102 : vector<32x256xf32> to vector<1x32x256xf32>
    tpu.vector_store %arg7[%c0_44, %c0_45, %c0_46], %105 {strides = array<i32>} : memref<1x32x256xf32, #tpu.memory_space<vmem>>, vector<1x32x256xf32>,
    return
  }
  func.func @transform_0(%arg0: i32) -> (i32, i32, i32) {
    %c0_i32 = arith.constant 0 : i32
    %c0_i32_0 = arith.constant 0 : i32
    %c0_i32_1 = arith.constant 0 : i32
    return %arg0, %c0_i32, %c0_i32_0 : i32, i32, i32
  }
  func.func @transform_1(%arg0: i32) -> (i32, i32, i32) {
    %c0_i32 = arith.constant 0 : i32
    %c0_i32_0 = arith.constant 0 : i32
    %c0_i32_1 = arith.constant 0 : i32
    return %arg0, %c0_i32, %c0_i32_0 : i32, i32, i32
  }
  func.func @transform_2(%arg0: i32) -> (i32, i32) {
    %c0_i32 = arith.constant 0 : i32
    %c0_i32_0 = arith.constant 0 : i32
    %c0_i32_1 = arith.constant 0 : i32
    return %c0_i32, %c0_i32_0 : i32, i32
  }
  func.func @transform_3(%arg0: i32) -> (i32, i32) {
    %c0_i32 = arith.constant 0 : i32
    %c0_i32_0 = arith.constant 0 : i32
    %c0_i32_1 = arith.constant 0 : i32
    return %c0_i32, %c0_i32_0 : i32, i32
  }
  func.func @transform_4(%arg0: i32) -> (i32, i32) {
    %c0_i32 = arith.constant 0 : i32
    %c0_i32_0 = arith.constant 0 : i32
    %c0_i32_1 = arith.constant 0 : i32
    return %c0_i32, %c0_i32_0 : i32, i32
  }
  func.func @transform_5(%arg0: i32) -> i32 {
    %c0_i32 = arith.constant 0 : i32
    %c0_i32_0 = arith.constant 0 : i32
    return %c0_i32 : i32
  }
  func.func @transform_6(%arg0: i32) -> (i32, i32, i32) {
    %c0_i32 = arith.constant 0 : i32
    %c0_i32_0 = arith.constant 0 : i32
    %c0_i32_1 = arith.constant 0 : i32
    return %arg0, %c0_i32, %c0_i32_0 : i32, i32, i32
  }
}

</mosaic_0001>

<llo_original>
// kernel: tpu_custom_call.1
$region0: #{tpu_custom_call.1}
  #allocation0 [shape = 'u32[]', space=smem, size = 0x4, offset = 0x4, fixed_abs, tag = 'smem constant byte address 0x4 - core index']
  #allocation1 [shape = 'u32[144,128]{1,0:T(1,128)}', space=vmem, size = 0x12000, scoped, tag = 'internal scratch']
  %s0 = inlined_call_operand.hbm [shape: f32[2,32,256], index: 0, kind: input, shape index: {}]
  %s1 = inlined_call_operand.vmem [shape: f32[2,1,256], index: 1, kind: input, shape index: {}]
  %s2 = inlined_call_operand.vmem [shape: f32[32,4], index: 2, kind: input, shape index: {}]
  %s3 = inlined_call_operand.vmem [shape: f32[32,16], index: 3, kind: input, shape index: {}]
  %s4 = inlined_call_operand.vmem [shape: f32[2,16], index: 4, kind: input, shape index: {}]
  %s5 = inlined_call_operand.vmem [shape: f32[2], index: 5, kind: input, shape index: {}]
  %s6 = inlined_call_operand.hbm [shape: f32[2,32,256], index: 6, kind: output, shape index: {}]
  %s7 = sld [smem:[#allocation0]]
  $region65: #{tpu_custom_call.1} parent=0
    _
  %s9 = ssub.s32 1, %s7
  %s10 = scalar_select 0, %s9, %s7
  $region1: #{tpu_custom_call.1} parent=0
    #allocation2 [shape = 'u8[65536]{0}', space=vmem, size = 0x10000, scoped, tag = 'input window, operand 0']
    #allocation3 [shape = 's32[2]{0}', space=sflag, size = 0x8, scoped, tag = 'scoped memory for tpu_custom_call.1']
    #allocation4 [shape = 's32[2]{0}', space=sflag, size = 0x8, scoped, tag = 'scoped memory for tpu_custom_call.1']
    #allocation5 [shape = 's32[2]{0}', space=sflag, size = 0x8, scoped, tag = 'scoped memory for tpu_custom_call.1']
    #allocation6 [shape = 'u8[512]{0}', space=smem, size = 0x200, scoped, tag = 'input window, operand 5, single buffered']
    #allocation7 [shape = 'u8[65536]{0}', space=vmem, size = 0x10000, scoped, tag = 'output window, operand 0']
    %11 = vsyncpa [#allocation3], 0
    %s12 = scalar_lea.sflag [#allocation3], 1
    %13 = vsyncpa %s12, 0
    %14 = vsyncpa [#allocation5], 0
    %15 = vsyncpa [#allocation4], 0
    %s16 = scalar_lea.sflag [#allocation4], 1
    %17 = vsyncpa %s16, 0
    loop: start=0, step=1, limit=4
    $region2: #{tpu_custom_call.1} parent=1 // loop_pre_header
      _
    $region3: #{tpu_custom_call.1} parent=1 // loop_header
      %s19 = sphi 0, %s23
      %p20 = scmp.ge.s32.totalorder %s19, 4
      %s29 = sphi 0, %s31
      %s32 = sphi 0, %s29
      %s33 = sphi 0, %s32
      %s49 = sphi 0, %s33
      %s55 = sphi 0, %s57
      %s58 = sphi 0, %s55
      %s59 = sphi 0, %s58
      %s75 = sphi 0, %s59
      %s79 = sphi 0, %s79
      %s81 = sphi 0, %s79
      %s82 = sphi 0, %s81
      %s96 = sphi 0, %s82
      %s100 = sphi 0, %s100
      %s102 = sphi 0, %s100
      %s103 = sphi 0, %s102
      %s117 = sphi 0, %s103
      %s121 = sphi 0, %s121
      %s123 = sphi 0, %s121
      %s124 = sphi 0, %s123
      %s138 = sphi 0, %s124
      %s142 = sphi 0, %s142
      %s144 = sphi 0, %s142
      %s145 = sphi 0, %s144
      %s159 = sphi 0, %s145
      %s165 = sphi 0, %s167
      %s168 = sphi 0, %s165
      %s169 = sphi 0, %s168
      %s185 = sphi 0, %s169
    $region4: #{tpu_custom_call.1} parent=1 // loop_header_branch
      %22 = sbr.rel (%p20) target = $region8
    $region5: #{tpu_custom_call.1} parent=1 // loop_body
      %s24 = ssub.s32 %s19, 1
      %s25 = ssub.s32 %s19, 2
      %s26 = sadd.s32 %s19, 1
      %s27 = ssub.s32 %s19, %s26
      %p28 = scmp.eq.s32.totalorder %s27, 0
      %s30 = sadd.s32 %s29, 1
      %s31 = scalar_select %p28, %s29, %s30
      %p34 = pneg %p28
      %p35 = scmp.eq.s32.totalorder %s19, 1
      %p36 = por %p34, %p35
      %p37 = scmp.ne.s32.totalorder %s29, %s32
      %p38 = scmp.eq.s32.totalorder %s19, 0
      %p39 = por %p37, %p38
      %p40 = scmp.ne.s32.totalorder %s29, %s32
      %p41 = scmp.eq.s32.totalorder %s24, 1
      %p42 = por %p40, %p41
      %p43 = scmp.ne.s32.totalorder %s32, %s33
      %p44 = scmp.eq.s32.totalorder %s24, 0
      %p45 = por %p43, %p44
      %p46 = scmp.ne.s32.totalorder %s32, %s33
      %p47 = scmp.eq.s32.totalorder %s25, 1
      %p48 = por %p46, %p47
      %p50 = scmp.ne.s32.totalorder %s33, %s49
      %p51 = scmp.eq.s32.totalorder %s25, 0
      %p52 = por %p50, %p51
      %s53 = ssub.s32 %s19, %s26
      %p54 = scmp.eq.s32.totalorder %s53, 0
      %s56 = sadd.s32 %s55, 1
      %s57 = scalar_select %p54, %s55, %s56
      %p60 = pneg %p54
      %p61 = scmp.eq.s32.totalorder %s19, 1
      %p62 = por %p60, %p61
      %p63 = scmp.ne.s32.totalorder %s55, %s58
      %p64 = scmp.eq.s32.totalorder %s19, 0
      %p65 = por %p63, %p64
      %p66 = scmp.ne.s32.totalorder %s55, %s58
      %p67 = scmp.eq.s32.totalorder %s24, 1
      %p68 = por %p66, %p67
      %p69 = scmp.ne.s32.totalorder %s58, %s59
      %p70 = scmp.eq.s32.totalorder %s24, 0
      %p71 = por %p69, %p70
      %p72 = scmp.ne.s32.totalorder %s58, %s59
      %p73 = scmp.eq.s32.totalorder %s25, 1
      %p74 = por %p72, %p73
      %p76 = scmp.ne.s32.totalorder %s59, %s75
      %p77 = scmp.eq.s32.totalorder %s25, 0
      %p78 = por %p76, %p77
      %s80 = sadd.s32 %s79, 1
      %p83 = scmp.eq.s32.totalorder %s19, 1
      %p84 = scmp.ne.s32.totalorder %s79, %s81
      %p85 = scmp.eq.s32.totalorder %s19, 0
      %p86 = por %p84, %p85
      %p87 = scmp.ne.s32.totalorder %s79, %s81
      %p88 = scmp.eq.s32.totalorder %s24, 1
      %p89 = por %p87, %p88
      %p90 = scmp.ne.s32.totalorder %s81, %s82
      %p91 = scmp.eq.s32.totalorder %s24, 0
      %p92 = por %p90, %p91
      %p93 = scmp.ne.s32.totalorder %s81, %s82
      %p94 = scmp.eq.s32.totalorder %s25, 1
      %p95 = por %p93, %p94
      %p97 = scmp.ne.s32.totalorder %s82, %s96
      %p98 = scmp.eq.s32.totalorder %s25, 0
      %p99 = por %p97, %p98
      %s101 = sadd.s32 %s100, 1
      %p104 = scmp.eq.s32.totalorder %s19, 1
      %p105 = scmp.ne.s32.totalorder %s100, %s102
      %p106 = scmp.eq.s32.totalorder %s19, 0
      %p107 = por %p105, %p106
      %p108 = scmp.ne.s32.totalorder %s100, %s102
      %p109 = scmp.eq.s32.totalorder %s24, 1
      %p110 = por %p108, %p109
      %p111 = scmp.ne.s32.totalorder %s102, %s103
      %p112 = scmp.eq.s32.totalorder %s24, 0
      %p113 = por %p111, %p112
      %p114 = scmp.ne.s32.totalorder %s102, %s103
      %p115 = scmp.eq.s32.totalorder %s25, 1
      %p116 = por %p114, %p115
      %p118 = scmp.ne.s32.totalorder %s103, %s117
      %p119 = scmp.eq.s32.totalorder %s25, 0
      %p120 = por %p118, %p119
      %s122 = sadd.s32 %s121, 1
      %p125 = scmp.eq.s32.totalorder %s19, 1
      %p126 = scmp.ne.s32.totalorder %s121, %s123
      %p127 = scmp.eq.s32.totalorder %s19, 0
      %p128 = por %p126, %p127
      %p129 = scmp.ne.s32.totalorder %s121, %s123
      %p130 = scmp.eq.s32.totalorder %s24, 1
      %p131 = por %p129, %p130
      %p132 = scmp.ne.s32.totalorder %s123, %s124
      %p133 = scmp.eq.s32.totalorder %s24, 0
      %p134 = por %p132, %p133
      %p135 = scmp.ne.s32.totalorder %s123, %s124
      %p136 = scmp.eq.s32.totalorder %s25, 1
      %p137 = por %p135, %p136
      %p139 = scmp.ne.s32.totalorder %s124, %s138
      %p140 = scmp.eq.s32.totalorder %s25, 0
      %p141 = por %p139, %p140
      %s143 = sadd.s32 %s142, 1
      %p146 = scmp.eq.s32.totalorder %s19, 1
      %p147 = scmp.ne.s32.totalorder %s142, %s144
      %p148 = scmp.eq.s32.totalorder %s19, 0
      %p149 = por %p147, %p148
      %p150 = scmp.ne.s32.totalorder %s142, %s144
      %p151 = scmp.eq.s32.totalorder %s24, 1
      %p152 = por %p150, %p151
      %p153 = scmp.ne.s32.totalorder %s144, %s145
      %p154 = scmp.eq.s32.totalorder %s24, 0
      %p155 = por %p153, %p154
      %p156 = scmp.ne.s32.totalorder %s144, %s145
      %p157 = scmp.eq.s32.totalorder %s25, 1
      %p158 = por %p156, %p157
      %p160 = scmp.ne.s32.totalorder %s145, %s159
      %p161 = scmp.eq.s32.totalorder %s25, 0
      %p162 = por %p160, %p161
      %s163 = ssub.s32 %s19, %s26
      %p164 = scmp.eq.s32.totalorder %s163, 0
      %s166 = sadd.s32 %s165, 1
      %s167 = scalar_select %p164, %s165, %s166
      %p170 = pneg %p164
      %p171 = scmp.eq.s32.totalorder %s19, 1
      %p172 = por %p170, %p171
      %p173 = scmp.ne.s32.totalorder %s165, %s168
      %p174 = scmp.eq.s32.totalorder %s19, 0
      %p175 = por %p173, %p174
      %p176 = scmp.ne.s32.totalorder %s165, %s168
      %p177 = scmp.eq.s32.totalorder %s24, 1
      %p178 = por %p176, %p177
      %p179 = scmp.ne.s32.totalorder %s168, %s169
      %p180 = scmp.eq.s32.totalorder %s24, 0
      %p181 = por %p179, %p180
      %p182 = scmp.ne.s32.totalorder %s168, %s169
      %p183 = scmp.eq.s32.totalorder %s25, 1
      %p184 = por %p182, %p183
      %p186 = scmp.ne.s32.totalorder %s169, %s185
      %p187 = scmp.eq.s32.totalorder %s25, 0
      %p188 = por %p186, %p187
      %p189 = scmp.le.s32.totalorder 1, %s19
      %p190 = scmp.lt.s32.totalorder %s19, 3
      %p191 = pnand %p189, %p190
      %p192 = pneg %p191
      // Predicated region
      $region9: #{tpu_custom_call.1} parent=5 // pred_check
        _
      $region10: #{tpu_custom_call.1} parent=5 // pred_check_branch
        %194 = sbr.rel (%p191) target = $region12
      $region11: #{tpu_custom_call.1} parent=5 // pred_region
        %s195 = ssub.s32 %s19, 1
        // Predicated region
        $region13: #{tpu_custom_call.1} parent=11 // pred_check
          %p196 = pneg %p92
        $region14: #{tpu_custom_call.1} parent=11 // pred_check_branch
          %198 = sbr.rel (%p196) target = $region16
        $region15: #{tpu_custom_call.1} parent=11 // pred_region
          _
        $region16: #{tpu_custom_call.1} parent=11 // pred_fallthru
          _
        // Predicated region
        $region17: #{tpu_custom_call.1} parent=11 // pred_check
          %p199 = pneg %p113
        $region18: #{tpu_custom_call.1} parent=11 // pred_check_branch
          %201 = sbr.rel (%p199) target = $region20
        $region19: #{tpu_custom_call.1} parent=11 // pred_region
          _
        $region20: #{tpu_custom_call.1} parent=11 // pred_fallthru
          _
        // Predicated region
        $region21: #{tpu_custom_call.1} parent=11 // pred_check
          %p202 = pneg %p134
        $region22: #{tpu_custom_call.1} parent=11 // pred_check_branch
          %204 = sbr.rel (%p202) target = $region24
        $region23: #{tpu_custom_call.1} parent=11 // pred_region
          _
        $region24: #{tpu_custom_call.1} parent=11 // pred_fallthru
          _
        // Predicated region
        $region25: #{tpu_custom_call.1} parent=11 // pred_check
          %p205 = pneg %p155
        $region26: #{tpu_custom_call.1} parent=11 // pred_check_branch
          %207 = sbr.rel (%p205) target = $region28
        $region27: #{tpu_custom_call.1} parent=11 // pred_region
          %s209 = ssub.s32 16, 16
          %210 = vsyncadd [#allocation5], %s209
          %s212 = sshll.u32 %s5, 4
          %s213 = int_to_ptr.vmem [resolvable:$true] %s212
          %215 = dma.vmem_to_smem %s213, 16, [#allocation6], [#allocation5]
        $region28: #{tpu_custom_call.1} parent=11 // pred_fallthru
          _
      $region12: #{tpu_custom_call.1} parent=5 // pred_fallthru
        _
      %p216 = scmp.lt.s32.totalorder %s19, 2
      // Predicated region
      $region29: #{tpu_custom_call.1} parent=5 // pred_check
        %p217 = pneg %p216
      $region30: #{tpu_custom_call.1} parent=5 // pred_check_branch
        %219 = sbr.rel (%p217) target = $region32
      $region31: #{tpu_custom_call.1} parent=5 // pred_region
        // Predicated region
        $region33: #{tpu_custom_call.1} parent=31 // pred_check
          %p220 = pneg %p39
        $region34: #{tpu_custom_call.1} parent=31 // pred_check_branch
          %222 = sbr.rel (%p220) target = $region36
        $region35: #{tpu_custom_call.1} parent=31 // pred_region
          %s223 = sand.u32 %s29, 1
          %s224 = scalar_lea.sflag [#allocation3], %s223
          %s225 = sand.u32 %s29, 1
          %s226 = smul.addr %s225, 64
          %s227 = scalar_lea.vmem [#allocation2], %s226
          %s229 = ssub.s32 1024, 1024
          %230 = vsyncadd %s224, %s229
          %s231 = smul.addr %s19, 8
          %s232 = smul.addr %s231, 128
          %s233 = scalar_lea.hbm %s0, %s232
          %s234 = sshll.u32 %s227, 4
          %s235 = int_to_ptr.vmem [resolvable:$true] %s234
          %240 = dma.hbm_to_vmem [thread:$0]  %s233, 1024, %s235, %s224, 256, 256, 16
        $region36: #{tpu_custom_call.1} parent=31 // pred_fallthru
          _
        // Predicated region
        $region37: #{tpu_custom_call.1} parent=31 // pred_check
          %p241 = pneg %p65
        $region38: #{tpu_custom_call.1} parent=31 // pred_check_branch
          %243 = sbr.rel (%p241) target = $region40
        $region39: #{tpu_custom_call.1} parent=31 // pred_region
          %p244 = scmp.lt.s32.totalorder %s19, 1
          %s245 = scalar_select %p244, %s19, 1
          %s246 = smul.addr %s245, 2
          %s247 = scalar_lea.vmem %s1, %s246
        $region40: #{tpu_custom_call.1} parent=31 // pred_fallthru
          _
      $region32: #{tpu_custom_call.1} parent=5 // pred_fallthru
        _
      %p248 = scmp.le.s32.totalorder 1, %s19
      %p249 = scmp.lt.s32.totalorder %s19, 3
      %p250 = pnand %p248, %p249
      %p251 = pneg %p250
      // Predicated region
      $region41: #{tpu_custom_call.1} parent=5 // pred_check
        _
      $region42: #{tpu_custom_call.1} parent=5 // pred_check_branch
        %253 = sbr.rel (%p250) target = $region44
      $region43: #{tpu_custom_call.1} parent=5 // pred_region
        %s254 = ssub.s32 %s19, 1
        %s255 = sand.u32 %s32, 1
        %s256 = scalar_lea.sflag [#allocation3], %s255
        %s257 = sand.u32 %s32, 1
        %s258 = smul.addr %s257, 64
        %s259 = scalar_lea.vmem [#allocation2], %s258
        // Predicated region
        $region45: #{tpu_custom_call.1} parent=43 // pred_check
          %p260 = pneg %p45
        $region46: #{tpu_custom_call.1} parent=43 // pred_check_branch
          %262 = sbr.rel (%p260) target = $region48
        $region47: #{tpu_custom_call.1} parent=43 // pred_region
          %263 = dma.done %s256, 1024
        $region48: #{tpu_custom_call.1} parent=43 // pred_fallthru
          _
        // Predicated region
        $region49: #{tpu_custom_call.1} parent=43 // pred_check
          %p264 = pneg %p155
        $region50: #{tpu_custom_call.1} parent=43 // pred_check_branch
          %266 = sbr.rel (%p264) target = $region52
        $region51: #{tpu_custom_call.1} parent=43 // pred_region
          %267 = dma.done [#allocation5], 16
        $region52: #{tpu_custom_call.1} parent=43 // pred_fallthru
          _
        %268 = sfence
        %s269 = sand.u32 %s32, 1
        %s270 = scalar_lea.sflag [#allocation3], %s269
        %s271 = sand.u32 %s32, 1
        %s272 = smul.addr %s271, 64
        %s273 = scalar_lea.vmem [#allocation2], %s272
        %p274 = pneg %p45
        %p275 = pneg %p42
        %p276 = scmp.lt.s32.totalorder %s24, 1
        %s277 = scalar_select %p276, %s24, 1
        %s278 = smul.addr %s277, 2
        %s279 = scalar_lea.vmem %s1, %s278
        %p280 = pneg %p71
        %p281 = pneg %p68
        %p282 = pneg %p92
        %p283 = pneg %p89
        %p284 = pneg %p113
        %p285 = pneg %p110
        %p286 = pneg %p134
        %p287 = pneg %p131
        %p288 = pneg %p155
        %p289 = pneg %p152
        %p290 = pneg %p181
        %p291 = pneg %p178
        %s292 = sand.u32 %s168, 1
        %s293 = scalar_lea.sflag [#allocation4], %s292
        %s294 = sand.u32 %s168, 1
        %s295 = smul.addr %s294, 64
        %s296 = scalar_lea.vmem [#allocation7], %s295
        %p297 = scmp.lt.s32.totalorder %s24, 1
        %s298 = scalar_select %p297, %s24, 1
        %s299 = smul.addr %s298, 2
        %s300 = scalar_lea.vmem %s1, %s299
        %v301 = vld [vmem:[%s259] sm:$0xff]
        %v302 = vld [vmem:[%s259 + $0x8] sm:$0xff]
        %v303 = vld [vmem:[%s259 + $0x10] sm:$0xff]
        %v304 = vld [vmem:[%s259 + $0x18] sm:$0xff]
        %v305 = vld [vmem:[%s259 + $0x20] sm:$0xff]
        %v306 = vld [vmem:[%s259 + $0x28] sm:$0xff]
        %v307 = vld [vmem:[%s259 + $0x30] sm:$0xff]
        %v308 = vld [vmem:[%s259 + $0x38] sm:$0xff]
        %v309 = vld [vmem:[%s300] sm:$0x3]
        %v310 = vadd.f32 %v301, %v302
        %311 = vadd.xlane.f32.xlu0 %v310
        %v312 = vpop.xlane.xlu0 %311
        %v313 = vadd.f32 %v303, %v304
        %314 = vadd.xlane.f32.xlu0 %v313
        %v315 = vpop.xlane.xlu0 %314
        %v316 = vadd.f32 %v305, %v306
        %317 = vadd.xlane.f32.xlu0 %v316
        %v318 = vpop.xlane.xlu0 %317
        %v319 = vadd.f32 %v307, %v308
        %320 = vadd.xlane.f32.xlu0 %v319
        %v321 = vpop.xlane.xlu0 %320
        %v322 = vrcp.pop 256.0
        %v323 = vmul.f32 %v312, %v322
        %v324 = vmul.f32 %v315, %v322
        %v325 = vmul.f32 %v318, %v322
        %v326 = vmul.f32 %v321, %v322
        %v327 = vld [vmem:[%s3] sm:$0xff]
        %v328 = vld [vmem:[%s3 + $0x8] sm:$0xff]
        %v329 = vld [vmem:[%s3 + $0x10] sm:$0xff]
        %v330 = vld [vmem:[%s3 + $0x18] sm:$0xff]
        %v331 = vmul.f32 %v327, %v323
        %v332 = vmul.f32 %v328, %v324
        %v333 = vmul.f32 %v329, %v325
        %v334 = vmul.f32 %v330, %v326
        %vm335 = vcmask 130048
        %v336 = vsel %vm335, %v331, 0.0
        %v337 = vsel %vm335, %v332, 0.0
        %v338 = vadd.f32 %v336, %v337
        %v339 = vsel %vm335, %v333, 0.0
        %v340 = vadd.f32 %v338, %v339
        %v341 = vsel %vm335, %v334, 0.0
        %v342 = vadd.f32 %v340, %v341
        %v343 = vrot.slane %v342, 4
        %v344 = vadd.f32 %v342, %v343
        %v345 = vrot.slane %v344, 2
        %v346 = vadd.f32 %v344, %v345
        %v347 = vrot.slane %v346, 1
        %v348 = vadd.f32 %v346, %v347
        %v349 = vld [vmem:[%s4] sm:$0x1]
        %v350 = vadd.f32 %v348, %v349
        %v351 = vmul.f32 %v350, 0.5
        %v352 = vmul.f32 %v350, 0.70710677
        %v353 = vand.u32 2147483647, %v352
        %v354 = vmul.f32 %v353, 0.3275911
        %v355 = vadd.f32 %v354, 1.0
        %v356 = vrcp.pop %v355
        %v357 = vmul.f32 1.0, %v356
        %v358 = vmul.f32 %v357, 1.0614054
        %v359 = vadd.f32 %v358, -1.4531521
        %v360 = vmul.f32 %v359, %v357
        %v361 = vadd.f32 %v360, 1.4214138
        %v362 = vmul.f32 %v361, %v357
        %v363 = vadd.f32 %v362, -0.28449672
        %v364 = vmul.f32 %v363, %v357
        %v365 = vadd.f32 %v364, 0.2548296
        %v366 = vmul.f32 %v365, %v357
        %v367 = vsub.f32 0.0, %v353
        %v368 = vmul.f32 %v367, %v353
        %v369 = vmul.f32 %v368, 1.442695
        %v370 = vpow.pop %v369
        %v371 = vmul.f32 %v366, %v370
        %v372 = vsub.f32 1.0, %v371
        %vm373 = vcmp.ge.f32.partialorder %v352, 0.0
        %v374 = vsub.f32 0.0, %v372
        %v375 = vsel %vm373, %v372, %v374
        %v376 = vadd.f32 %v375, 1.0
        %v377 = vmul.f32 %v351, %v376
        %v378 = vld [vmem:[%s4 + $0x1] sm:$0x1]
        %v379 = vmul.f32 %v377, %v378
        %vm380 = vcmask 122880
        %v381 = vsel %vm380, %v379, 0.0
        %382 = vadd.xlane.f32.xlu0 %v381
        %v383 = vpop.xlane.xlu0 %382
        %v384 = vld [vmem:[%s2] sm:$0xff]
        %v385 = vld [vmem:[%s2 + $0x8] sm:$0xff]
        %v386 = vld [vmem:[%s2 + $0x10] sm:$0xff]
        %v387 = vld [vmem:[%s2 + $0x18] sm:$0xff]
        %389 = vset.pattern.permute.xlu0 0
        %390 = vperm.xlu0 %389, %v384
        %v391 = vpop.permute.xlu0 %390
        %394 = vset.pattern.permute.xlu0 0
        %395 = vperm.xlu0 %394, %v385
        %v396 = vpop.permute.xlu0 %395
        %399 = vset.pattern.permute.xlu0 0
        %400 = vperm.xlu0 %399, %v386
        %v401 = vpop.permute.xlu0 %400
        %404 = vset.pattern.permute.xlu0 0
        %405 = vperm.xlu0 %404, %v387
        %v406 = vpop.permute.xlu0 %405
        %v408 = vmul.f32 %v301, %v391
        %v409 = vmul.f32 %v302, %v391
        %v410 = vmul.f32 %v303, %v396
        %v411 = vmul.f32 %v304, %v396
        %v412 = vmul.f32 %v305, %v401
        %v413 = vmul.f32 %v306, %v401
        %v414 = vmul.f32 %v307, %v406
        %v415 = vmul.f32 %v308, %v406
        %v416 = vadd.f32 %v408, %v410
        %v417 = vadd.f32 %v416, %v412
        %v418 = vadd.f32 %v417, %v414
        %v419 = vrot.slane %v418, 4
        %v420 = vadd.f32 %v418, %v419
        %v421 = vrot.slane %v420, 2
        %v422 = vadd.f32 %v420, %v421
        %v423 = vrot.slane %v422, 1
        %v424 = vadd.f32 %v422, %v423
        %v425 = vadd.f32 %v409, %v411
        %v426 = vadd.f32 %v425, %v413
        %v427 = vadd.f32 %v426, %v415
        %v428 = vrot.slane %v427, 4
        %v429 = vadd.f32 %v427, %v428
        %v430 = vrot.slane %v429, 2
        %v431 = vadd.f32 %v429, %v430
        %v432 = vrot.slane %v431, 1
        %v433 = vadd.f32 %v431, %v432
        %v434 = vld [vmem:[%s2] sm:$0xf]
        %436 = vset.pattern.permute.xlu0 1
        %437 = vperm.xlu0 %436, %v434
        %v438 = vpop.permute.xlu0 %437
        %v441 = vlaneseq
        %v442 = vshrl.u32 %v441, 7
        %v443 = vsub.s32 0, %v442
        %v444 = vrot.slane %v309, %v443
        %v445 = vlaneseq
        %v446 = vshrl.u32 %v445, 7
        %v447 = vsub.s32 1, %v446
        %v448 = vrot.slane %v309, %v447
        %v451 = vmul.f32 %v438, %v444
        %v452 = vmul.f32 %v438, %v448
        %453 = vset.pattern.permute.xlu0 2
        %454 = vperm.xlu0 %453, %v434
        %v455 = vpop.permute.xlu0 %454
        %v457 = vadd.f32 %v451, %v455
        %v458 = vadd.f32 %v452, %v455
        %vm459 = vcmp.gt.f32.partialorder %v457, 0.0
        %vm460 = vcmp.gt.f32.partialorder %v458, 0.0
        %v461 = vmin.f32 %v457, 0.0
        %v462 = vmin.f32 %v458, 0.0
        %v463 = vmul.f32 %v461, 1.442695
        %v464 = vpow.pop %v463
        %v465 = vmul.f32 %v462, 1.442695
        %v466 = vpow.pop %v465
        %v467 = vsub.f32 %v464, 1.0
        %v468 = vsub.f32 %v466, 1.0
        %v469 = vsel %vm459, %v457, %v467
        %v470 = vsel %vm460, %v458, %v468
        %471 = vset.pattern.permute.xlu0 3
        %472 = vperm.xlu0 %471, %v434
        %v473 = vpop.permute.xlu0 %472
        %v475 = vmul.f32 %v473, %v469
        %v476 = vmul.f32 %v473, %v470
        %vm477 = vcmask 1043456
        %v478 = vsel %vm477, %v475, 0.0
        %v479 = vrot.slane %v478, 4
        %v480 = vadd.f32 %v478, %v479
        %v481 = vrot.slane %v480, 2
        %v482 = vadd.f32 %v480, %v481
        %v483 = vrot.slane %v482, 1
        %v484 = vadd.f32 %v482, %v483
        %v485 = vsel %vm477, %v476, 0.0
        %v486 = vrot.slane %v485, 4
        %v487 = vadd.f32 %v485, %v486
        %v488 = vrot.slane %v487, 2
        %v489 = vadd.f32 %v487, %v488
        %v490 = vrot.slane %v489, 1
        %v491 = vadd.f32 %v489, %v490
        %s492 = sld [smem:[#allocation6]]
        %v493 = vadd.f32 %v424, %v484
        %v494 = vadd.f32 %v433, %v491
        %s495 = sld [smem:[#allocation6 + $0x1]]
        %v496 = vstv %s495
        %v497 = vadd.f32 %v383, %v496
        %v498 = vadd.f32 %v493, %v497
        %v499 = vadd.f32 %v494, %v497
        %v500 = vsub.f32 0.0, %v498
        %v501 = vsub.f32 0.0, %v499
        %v502 = vmul.f32 %v500, 1.442695
        %v503 = vpow.pop %v502
        %v504 = vmul.f32 %v501, 1.442695
        %v505 = vpow.pop %v504
        %v506 = vadd.f32 %v503, 1.0
        %v507 = vadd.f32 %v505, 1.0
        %v508 = vrcp.pop %v506
        %v509 = vrcp.pop %v507
        %v510 = vstv %s492
        %v511 = vmul.f32 %v510, %v508
        %v512 = vmul.f32 %v510, %v509
        %v513 = vadd.f32 %v511, 1.0
        %v514 = vadd.f32 %v512, 1.0
        %v515 = vlaneseq
        %v516 = vshrl.u32 %v515, 7
        %v517 = vsub.s32 0, %v516
        %v518 = vrot.slane %v513, %v517
        %v519 = vlaneseq
        %v520 = vshrl.u32 %v519, 7
        %v521 = vsub.s32 0, %v520
        %v522 = vrot.slane %v514, %v521
        %v523 = vmul.f32 %v301, %v518
        %v524 = vmul.f32 %v302, %v522
        %v525 = vmul.f32 %v303, %v518
        %v526 = vmul.f32 %v304, %v522
        %v527 = vmul.f32 %v305, %v518
        %v528 = vmul.f32 %v306, %v522
        %v529 = vmul.f32 %v307, %v518
        %v530 = vmul.f32 %v308, %v522
        %531 = vst [vmem:[%s296] sm:$0xff] %v523
        %532 = vst [vmem:[%s296 + $0x8] sm:$0xff] %v524
        %533 = vst [vmem:[%s296 + $0x10] sm:$0xff] %v525
        %534 = vst [vmem:[%s296 + $0x18] sm:$0xff] %v526
        %535 = vst [vmem:[%s296 + $0x20] sm:$0xff] %v527
        %536 = vst [vmem:[%s296 + $0x28] sm:$0xff] %v528
        %537 = vst [vmem:[%s296 + $0x30] sm:$0xff] %v529
        %538 = vst [vmem:[%s296 + $0x38] sm:$0xff] %v530
        %s539 = sand.u32 %s168, 1
        %s540 = scalar_lea.sflag [#allocation4], %s539
        %s541 = sand.u32 %s168, 1
        %s542 = smul.addr %s541, 64
        %s543 = scalar_lea.vmem [#allocation7], %s542
        // Predicated region
        $region53: #{tpu_custom_call.1} parent=43 // pred_check
          %p544 = pneg %p178
        $region54: #{tpu_custom_call.1} parent=43 // pred_check_branch
          %546 = sbr.rel (%p544) target = $region56
        $region55: #{tpu_custom_call.1} parent=43 // pred_region
          %s548 = ssub.s32 1024, 1024
          %549 = vsyncadd %s540, %s548
          %s550 = smul.addr %s24, 8
          %s551 = smul.addr %s550, 128
          %s552 = scalar_lea.hbm %s6, %s551
          %s553 = sshll.u32 %s543, 4
          %s554 = int_to_ptr.vmem [resolvable:$true] %s553
          %559 = dma.vmem_to_hbm [thread:$0]  %s554, 1024, %s552, %s540, 256, 256, 16
        $region56: #{tpu_custom_call.1} parent=43 // pred_fallthru
          _
      $region44: #{tpu_custom_call.1} parent=5 // pred_fallthru
        _
      %p560 = scmp.le.s32.totalorder 2, %s19
      // Predicated region
      $region57: #{tpu_custom_call.1} parent=5 // pred_check
        %p561 = pneg %p560
      $region58: #{tpu_custom_call.1} parent=5 // pred_check_branch
        %563 = sbr.rel (%p561) target = $region60
      $region59: #{tpu_custom_call.1} parent=5 // pred_region
        %s564 = ssub.s32 %s19, 2
        // Predicated region
        $region61: #{tpu_custom_call.1} parent=59 // pred_check
          %p565 = pneg %p184
        $region62: #{tpu_custom_call.1} parent=59 // pred_check_branch
          %567 = sbr.rel (%p565) target = $region64
        $region63: #{tpu_custom_call.1} parent=59 // pred_region
          %s568 = sand.u32 %s169, 1
          %s569 = scalar_lea.sflag [#allocation4], %s568
          %s570 = sand.u32 %s169, 1
          %s571 = smul.addr %s570, 64
          %s572 = scalar_lea.vmem [#allocation7], %s571
          %573 = dma.done %s569, 1024
        $region64: #{tpu_custom_call.1} parent=59 // pred_fallthru
          _
      $region60: #{tpu_custom_call.1} parent=5 // pred_fallthru
        _
    $region6: #{tpu_custom_call.1} parent=1 // loop_footer
      %s23 = sadd.s32 1, %s19
    $region7: #{tpu_custom_call.1} parent=1 // loop_footer_branch
      %18 = sbr.rel target = $region3
    $region8: #{tpu_custom_call.1} parent=1 // loop_exit
      _
    %574 = vsyncpa [#allocation3], 1
    %s575 = scalar_lea.sflag [#allocation3], 1
    %576 = vsyncpa %s575, 1
    %577 = vsyncpa [#allocation4], 1
    %s578 = scalar_lea.sflag [#allocation4], 1
    %579 = vsyncpa %s578, 1
    %580 = vsyncpa [#allocation5], 1
    %s581 = scalar_lea.sflag [#allocation5], 1
    %582 = vsyncpa %s581, 1

</llo_original>
